<compile_context>
chip_gen: v7x
topology: tpu7x:2x2x1
jax: 0.10.0
libtpu: 0.0.40
codegen_flags: <defaults>
</compile_context>

<pallas_src>
import jax
import jax.numpy as jnp
from jax import lax
from jax.experimental import pallas as pl
from jax.experimental.pallas import tpu as pltpu


def _round_up(x, m):
    return ((x + m - 1) // m) * m


# ----------------------------- Pallas kernels -----------------------------

def _conv_matmul_bias_relu_kernel(p_ref, w_ref, b_ref, o_ref):
    # p_ref: (TM, Kp)  im2col patches tile
    # w_ref: (Kp, Cp)  resident weight
    # b_ref: (1, Cp)   resident bias
    # o_ref: (TM, Cp)
    acc = jnp.dot(p_ref[...], w_ref[...], preferred_element_type=jnp.float32)
    acc = acc + b_ref[...]
    o_ref[...] = jnp.maximum(acc, 0.0).astype(o_ref.dtype)


def _maxpool3x3s2_kernel(x_ref, o_ref):
    # x_ref: (1, Hq, 2, Wq, 2*C)  conv output, zero padded, H/W phase-folded:
    #        x[n, hq, hp, wq, wp*C + c] == y_pad[n, 2*hq + hp, 2*wq + wp, c]
    # o_ref: (1, Hout, Wout, C)
    x = x_ref[...]
    _, hout, wout, c = o_ref.shape
    m = None
    # row offsets 0,1,2  -> (hq offset a, h phase hp)
    for a, hp in ((0, 0), (0, 1), (1, 0)):
        # col offsets 0,1,2 -> (wq offset b, w phase wp); phase = 128-aligned lane slice
        for b, wp in ((0, 0), (0, 1), (1, 0)):
            v = lax.slice(
                x,
                (0, a, hp, b, wp * c),
                (1, a + hout, hp + 1, b + wout, (wp + 1) * c))
            m = v if m is None else jnp.maximum(m, v)
    o_ref[...] = m.reshape(o_ref.shape)


# ------------------------------- Wrapper ----------------------------------

def wrn_init_block(x_nchw, weight, bias, *, tile_m=512):
    """Forward pass of WRNInitBlock.

    x_nchw: (N, Cin, H, W) float32
    weight: (Cout, Cin, 7, 7) float32   (PyTorch OIHW)
    bias:   (Cout,) float32
    returns: (N, Cout, H_pool, W_pool) float32
    """
    n, cin, h, w = x_nchw.shape
    cout, _, kh, kw = weight.shape
    stride, pad = 2, 3
    ho = (h + 2 * pad - kh) // stride + 1
    wo = (w + 2 * pad - kw) // stride + 1

    lane = 128
    k_dim = kh * kw * cin
    k_pad = _round_up(k_dim, lane)       # 147 -> 256: aligned, unmasked loads
    c_pad = _round_up(cout, lane)        # 16  -> 128: lane-dense output stores

    # ---- glue: im2col (strided XLA slices; channel-last patch order) ----
    x_nhwc = jnp.transpose(x_nchw, (0, 2, 3, 1)).astype(jnp.float32)
    xp = jnp.pad(x_nhwc, ((0, 0), (pad, pad), (pad, pad), (0, 0)))
    cols = []
    for ih in range(kh):
        for iw in range(kw):
            cols.append(lax.slice(
                xp,
                (0, ih, iw, 0),
                (n, ih + (ho - 1) * stride + 1, iw + (wo - 1) * stride + 1, cin),
                (1, stride, stride, 1)))
    m_rows = n * ho * wo
    patches = jnp.stack(cols, axis=3).reshape(m_rows, k_dim)

    tm = min(tile_m, _round_up(m_rows, 8))
    m_pad = _round_up(m_rows, tm)
    patches = jnp.pad(patches, ((0, m_pad - m_rows), (0, k_pad - k_dim)))

    w_mat = jnp.transpose(weight, (2, 3, 1, 0)).reshape(k_dim, cout).astype(jnp.float32)
    w_mat = jnp.pad(w_mat, ((0, k_pad - k_dim), (0, c_pad - cout)))
    b_mat = jnp.pad(bias.astype(jnp.float32).reshape(1, cout), ((0, 0), (0, c_pad - cout)))

    # ---- Pallas kernel 1: conv-as-matmul + bias + ReLU, tiled over M ----
    conv_out = pl.pallas_call(
        _conv_matmul_bias_relu_kernel,
        out_shape=jax.ShapeDtypeStruct((m_pad, c_pad), jnp.float32),
        grid=(m_pad // tm,),
        in_specs=[
            pl.BlockSpec((tm, k_pad), lambda i: (i, 0)),
            pl.BlockSpec((k_pad, c_pad), lambda i: (0, 0)),   # resident weight
            pl.BlockSpec((1, c_pad), lambda i: (0, 0)),       # resident bias
        ],
        out_specs=pl.BlockSpec((tm, c_pad), lambda i: (i, 0)),
        compiler_params=pltpu.CompilerParams(
            dimension_semantics=("parallel",)),
    )(patches, w_mat, b_mat)

    conv_out = conv_out[:m_rows].reshape(n, ho, wo, c_pad)

    # ---- glue: zero pad (exact post-ReLU) + free phase-fold reshapes (no transposes) ----
    h_out = (ho + 2 - 3) // 2 + 1
    w_out = (wo + 2 - 3) // 2 + 1
    hp2 = _round_up(ho + 2, 2)           # pool pad 1 each side (+1 even-ing row, never read)
    wp2 = _round_up(wo + 2, 2)
    hq, wq = hp2 // 2, wp2 // 2
    y = jnp.pad(conv_out, ((0, 0), (1, hp2 - ho - 1), (1, wp2 - wo - 1), (0, 0)))
    y = y.reshape(n, hq, 2, wq, 2 * c_pad)   # pure reshape: lane dim = 2*Cpad = 256

    # ---- Pallas kernel 2: MaxPool2d(kernel=3, stride=2, pad=1), 9 slice-maxima ----
    pooled = pl.pallas_call(
        _maxpool3x3s2_kernel,
        out_shape=jax.ShapeDtypeStruct((n, h_out, w_out, c_pad), jnp.float32),
        grid=(n,),
        in_specs=[pl.BlockSpec((1, hq, 2, wq, 2 * c_pad), lambda i: (i, 0, 0, 0, 0))],
        out_specs=pl.BlockSpec((1, h_out, w_out, c_pad), lambda i: (i, 0, 0, 0)),
        compiler_params=pltpu.CompilerParams(
            dimension_semantics=("parallel",)),
    )(y)

    # drop channel padding, back to NCHW
    return jnp.transpose(pooled[..., :cout], (0, 3, 1, 2))


# --------------------------- reference (pure JAX) ---------------------------

def _reference(x_nchw, weight, bias):
    y = lax.conv_general_dilated(
        x_nchw, weight, window_strides=(2, 2), padding=((3, 3), (3, 3)),
        dimension_numbers=("NCHW", "OIHW", "NCHW"))
    y = y + bias[None, :, None, None]
    y = jnp.maximum(y, 0.0)
    y = lax.reduce_window(
        y, -jnp.inf, lax.max,
        window_dimensions=(1, 1, 3, 3), window_strides=(1, 1, 2, 2),
        padding=((0, 0), (0, 0), (1, 1), (1, 1)))
    return y


if __name__ == "__main__":
    key = jax.random.PRNGKey(0)
    kx, kwt, kb = jax.random.split(key, 3)

    N, CIN, H, W = 2, 3, 16, 16
    COUT = 16

    x = jax.random.normal(kx, (N, CIN, H, W), dtype=jnp.float32)
    weight = jax.random.normal(kwt, (COUT, CIN, 7, 7), dtype=jnp.float32) * 0.1
    bias = jax.random.normal(kb, (COUT,), dtype=jnp.float32) * 0.1

    out = jax.block_until_ready(wrn_init_block(x, weight, bias))
    ref = jax.block_until_ready(_reference(x, weight, bias))

    assert out.shape == (N, COUT, 4, 4), out.shape
    assert jnp.allclose(out, ref, atol=2e-3, rtol=2e-3), \
        f"max abs diff {jnp.max(jnp.abs(out - ref))}"

    print("KERNEL_OK")
</pallas_src>

<mosaic_0001>
module attributes {stable_mosaic.version = 11 : i64} {
  func.func @_conv_matmul_bias_relu_kernel(%arg0: i32, %arg1: memref<128x256xf32, #tpu.memory_space<vmem>>, %arg2: memref<256x128xf32, #tpu.memory_space<vmem>>, %arg3: memref<1x128xf32, #tpu.memory_space<vmem>>, %arg4: memref<128x128xf32, #tpu.memory_space<vmem>>) attributes {dimension_semantics = [#tpu.dimension_semantics<parallel>], iteration_bounds = array<i64: 1>, scalar_prefetch = 0 : i64, scratch_operands = 0 : i64, tpu.core_type = #tpu.core_type<tc>, window_params = [{transform_indices = @transform_0, window_bounds = array<i64: 128, 256>}, {pipeline_mode = #tpu.pipeline_mode<synchronous>, transform_indices = @transform_1, window_bounds = array<i64: 256, 128>}, {pipeline_mode = #tpu.pipeline_mode<synchronous>, transform_indices = @transform_2, window_bounds = array<i64: 1, 128>}, {transform_indices = @transform_3, window_bounds = array<i64: 128, 128>}]} {
    %c0 = arith.constant 0 : index
    %c0_0 = arith.constant 0 : index
    %0 = vector.load %arg1[%c0, %c0_0] : memref<128x256xf32, #tpu.memory_space<vmem>>, vector<128x256xf32>
    %c0_1 = arith.constant 0 : index
    %c0_2 = arith.constant 0 : index
    %1 = vector.load %arg2[%c0_1, %c0_2] : memref<256x128xf32, #tpu.memory_space<vmem>>, vector<256x128xf32>
    %cst = arith.constant dense<0.000000e+00> : vector<128x128xf32>
    %2 = tpu.matmul %0, %1, %cst {dimension_numbers = #tpu.dot_dimension_numbers<[1], [0], [0], [1], [0, 0, 1, 1], [], []>} : vector<128x256xf32>, vector<256x128xf32>, vector<128x128xf32> -> vector<128x128xf32>
    %c0_3 = arith.constant 0 : index
    %c0_4 = arith.constant 0 : index
    %3 = vector.load %arg3[%c0_3, %c0_4] : memref<1x128xf32, #tpu.memory_space<vmem>>, vector<1x128xf32>
    %4 = vector.broadcast %3 : vector<1x128xf32> to vector<128x128xf32>
    %5 = arith.addf %2, %4 : vector<128x128xf32>
    %cst_5 = arith.constant 0.000000e+00 : f32
    %6 = vector.broadcast %cst_5 : f32 to vector<128x128xf32>
    %7 = arith.maximumf %5, %6 : vector<128x128xf32>
    %c0_6 = arith.constant 0 : index
    %c0_7 = arith.constant 0 : index
    %8 = vector.load %arg4[%c0_6, %c0_7] : memref<128x128xf32, #tpu.memory_space<vmem>>, vector<128x128xf32>
    tpu.vector_store %arg4[%c0_6, %c0_7], %7 {strides = array<i32>} : memref<128x128xf32, #tpu.memory_space<vmem>>, vector<128x128xf32>,
    return
  }
  func.func @transform_0(%arg0: i32) -> (i32, i32) {
    %c0_i32 = arith.constant 0 : i32
    %c0_i32_0 = arith.constant 0 : i32
    return %arg0, %c0_i32 : i32, i32
  }
  func.func @transform_1(%arg0: i32) -> (i32, i32) {
    %c0_i32 = arith.constant 0 : i32
    %c0_i32_0 = arith.constant 0 : i32
    %c0_i32_1 = arith.constant 0 : i32
    return %c0_i32, %c0_i32_0 : i32, i32
  }
  func.func @transform_2(%arg0: i32) -> (i32, i32) {
    %c0_i32 = arith.constant 0 : i32
    %c0_i32_0 = arith.constant 0 : i32
    %c0_i32_1 = arith.constant 0 : i32
    return %c0_i32, %c0_i32_0 : i32, i32
  }
  func.func @transform_3(%arg0: i32) -> (i32, i32) {
    %c0_i32 = arith.constant 0 : i32
    %c0_i32_0 = arith.constant 0 : i32
    return %arg0, %c0_i32 : i32, i32
  }
}

</mosaic_0001>

<llo_original>
// kernel: tpu_custom_call.1
$region0: #{tpu_custom_call.1}
  #allocation0 [shape = 'u32[]', space=smem, size = 0x4, offset = 0x4, fixed_abs, tag = 'smem constant byte address 0x4 - core index']
  #allocation1 [shape = 'u32[144,128]{1,0:T(1,128)}', space=vmem, size = 0x12000, scoped, tag = 'internal scratch']
  %s0 = inlined_call_operand.hbm [shape: f32[128,256], index: 0, kind: input, shape index: {}]
  %s1 = inlined_call_operand.hbm [shape: f32[256,128], index: 1, kind: input, shape index: {}]
  %s2 = inlined_call_operand.vmem [shape: f32[1,128], index: 2, kind: input, shape index: {}]
  %s3 = inlined_call_operand.hbm [shape: f32[128,128], index: 3, kind: output, shape index: {}]
  %s4 = sld [smem:[#allocation0]]
  $region30: #{tpu_custom_call.1} parent=0
    _
  %s6 = ssub.s32 1, %s4
  %s7 = scalar_select 0, %s6, %s4
  $region1: #{tpu_custom_call.1} parent=0
    #allocation2 [shape = 'u8[131072]{0}', space=vmem, size = 0x20000, scoped, tag = 'input window, operand 0, single buffered']
    #allocation3 [shape = 's32[1]{0}', space=sflag, size = 0x4, scoped, tag = 'scoped memory for tpu_custom_call.1']
    #allocation4 [shape = 's32[1]{0}', space=sflag, size = 0x4, scoped, tag = 'scoped memory for tpu_custom_call.1']
    #allocation5 [shape = 'u8[131072]{0}', space=vmem, size = 0x20000, scoped, tag = 'input window, operand 1, single buffered']
    #allocation6 [shape = 's32[1]{0}', space=sflag, size = 0x4, scoped, tag = 'scoped memory for tpu_custom_call.1']
    #allocation7 [shape = 'u8[65536]{0}', space=vmem, size = 0x10000, scoped, tag = 'output window, operand 0, single buffered']
    %8 = vsyncpa [#allocation3], 0
    %9 = vsyncpa [#allocation6], 0
    %10 = vsyncpa [#allocation4], 0
    // Predicated region
    $region2: #{tpu_custom_call.1} parent=1 // pred_check
      _
    $region3: #{tpu_custom_call.1} parent=1 // pred_check_branch
      %12 = sbr.rel (0) target = $region5
    $region4: #{tpu_custom_call.1} parent=1 // pred_region
      %s14 = ssub.s32 4096, 4096
      %15 = vsyncadd [#allocation3], %s14
      %s16 = sshll.u32 [#allocation2], 4
      %s17 = int_to_ptr.vmem [resolvable:$true] %s16
      %22 = dma.hbm_to_vmem [thread:$0]  %s0, 4096, %s17, [#allocation3], 256, 256, 16
    $region5: #{tpu_custom_call.1} parent=1 // pred_fallthru
      _
    // Predicated region
    $region6: #{tpu_custom_call.1} parent=1 // pred_check
      _
    $region7: #{tpu_custom_call.1} parent=1 // pred_check_branch
      %24 = sbr.rel (0) target = $region9
    $region8: #{tpu_custom_call.1} parent=1 // pred_region
      %s26 = ssub.s32 4096, 4096
      %27 = vsyncadd [#allocation6], %s26
      %s28 = sshll.u32 [#allocation5], 4
      %s29 = int_to_ptr.vmem [resolvable:$true] %s28
      %34 = dma.hbm_to_vmem [thread:$0]  %s1, 4096, %s29, [#allocation6], 128, 128, 8
    $region9: #{tpu_custom_call.1} parent=1 // pred_fallthru
      _
    // Predicated region
    $region10: #{tpu_custom_call.1} parent=1 // pred_check
      _
    $region11: #{tpu_custom_call.1} parent=1 // pred_check_branch
      %36 = sbr.rel (0) target = $region13
    $region12: #{tpu_custom_call.1} parent=1 // pred_region
      _
    $region13: #{tpu_custom_call.1} parent=1 // pred_fallthru
      _
    // Predicated region
    $region14: #{tpu_custom_call.1} parent=1 // pred_check
      _
    $region15: #{tpu_custom_call.1} parent=1 // pred_check_branch
      %38 = sbr.rel (0) target = $region17
    $region16: #{tpu_custom_call.1} parent=1 // pred_region
      %39 = dma.done [#allocation3], 4096
    $region17: #{tpu_custom_call.1} parent=1 // pred_fallthru
      _
    // Predicated region
    $region18: #{tpu_custom_call.1} parent=1 // pred_check
      _
    $region19: #{tpu_custom_call.1} parent=1 // pred_check_branch
      %41 = sbr.rel (0) target = $region21
    $region20: #{tpu_custom_call.1} parent=1 // pred_region
      %42 = dma.done [#allocation6], 4096
    $region21: #{tpu_custom_call.1} parent=1 // pred_fallthru
      _
    %v43 = vld [vmem:[#allocation2] sm:$0xff]
    %v44 = vld [vmem:[#allocation2 + $0x8] sm:$0xff]
    %v45 = vld [vmem:[#allocation2 + $0x10] sm:$0xff]
    %v46 = vld [vmem:[#allocation2 + $0x18] sm:$0xff]
    %v47 = vld [vmem:[#allocation2 + $0x20] sm:$0xff]
    %v48 = vld [vmem:[#allocation2 + $0x28] sm:$0xff]
    %v49 = vld [vmem:[#allocation2 + $0x30] sm:$0xff]
    %v50 = vld [vmem:[#allocation2 + $0x38] sm:$0xff]
    %v51 = vld [vmem:[#allocation2 + $0x40] sm:$0xff]
    %v52 = vld [vmem:[#allocation2 + $0x48] sm:$0xff]
    %v53 = vld [vmem:[#allocation2 + $0x50] sm:$0xff]
    %v54 = vld [vmem:[#allocation2 + $0x58] sm:$0xff]
    %v55 = vld [vmem:[#allocation2 + $0x60] sm:$0xff]
    %v56 = vld [vmem:[#allocation2 + $0x68] sm:$0xff]
    %v57 = vld [vmem:[#allocation2 + $0x70] sm:$0xff]
    %v58 = vld [vmem:[#allocation2 + $0x78] sm:$0xff]
    %v59 = vld [vmem:[#allocation2 + $0x80] sm:$0xff]
    %v60 = vld [vmem:[#allocation2 + $0x88] sm:$0xff]
    %v61 = vld [vmem:[#allocation2 + $0x90] sm:$0xff]
    %v62 = vld [vmem:[#allocation2 + $0x98] sm:$0xff]
    %v63 = vld [vmem:[#allocation2 + $0xa0] sm:$0xff]
    %v64 = vld [vmem:[#allocation2 + $0xa8] sm:$0xff]
    %v65 = vld [vmem:[#allocation2 + $0xb0] sm:$0xff]
    %v66 = vld [vmem:[#allocation2 + $0xb8] sm:$0xff]
    %v67 = vld [vmem:[#allocation2 + $0xc0] sm:$0xff]
    %v68 = vld [vmem:[#allocation2 + $0xc8] sm:$0xff]
    %v69 = vld [vmem:[#allocation2 + $0xd0] sm:$0xff]
    %v70 = vld [vmem:[#allocation2 + $0xd8] sm:$0xff]
    %v71 = vld [vmem:[#allocation2 + $0xe0] sm:$0xff]
    %v72 = vld [vmem:[#allocation2 + $0xe8] sm:$0xff]
    %v73 = vld [vmem:[#allocation2 + $0xf0] sm:$0xff]
    %v74 = vld [vmem:[#allocation2 + $0xf8] sm:$0xff]
    %v75 = vld [vmem:[#allocation5] sm:$0xff]
    %v76 = vld [vmem:[#allocation5 + $0x8] sm:$0xff]
    %v77 = vld [vmem:[#allocation5 + $0x10] sm:$0xff]
    %v78 = vld [vmem:[#allocation5 + $0x18] sm:$0xff]
    %v79 = vld [vmem:[#allocation5 + $0x20] sm:$0xff]
    %v80 = vld [vmem:[#allocation5 + $0x28] sm:$0xff]
    %v81 = vld [vmem:[#allocation5 + $0x30] sm:$0xff]
    %v82 = vld [vmem:[#allocation5 + $0x38] sm:$0xff]
    %v83 = vld [vmem:[#allocation5 + $0x40] sm:$0xff]
    %v84 = vld [vmem:[#allocation5 + $0x48] sm:$0xff]
    %v85 = vld [vmem:[#allocation5 + $0x50] sm:$0xff]
    %v86 = vld [vmem:[#allocation5 + $0x58] sm:$0xff]
    %v87 = vld [vmem:[#allocation5 + $0x60] sm:$0xff]
    %v88 = vld [vmem:[#allocation5 + $0x68] sm:$0xff]
    %v89 = vld [vmem:[#allocation5 + $0x70] sm:$0xff]
    %v90 = vld [vmem:[#allocation5 + $0x78] sm:$0xff]
    %v91 = vld [vmem:[#allocation5 + $0x80] sm:$0xff]
    %v92 = vld [vmem:[#allocation5 + $0x88] sm:$0xff]
    %v93 = vld [vmem:[#allocation5 + $0x90] sm:$0xff]
    %v94 = vld [vmem:[#allocation5 + $0x98] sm:$0xff]
    %v95 = vld [vmem:[#allocation5 + $0xa0] sm:$0xff]
    %v96 = vld [vmem:[#allocation5 + $0xa8] sm:$0xff]
    %v97 = vld [vmem:[#allocation5 + $0xb0] sm:$0xff]
    %v98 = vld [vmem:[#allocation5 + $0xb8] sm:$0xff]
    %v99 = vld [vmem:[#allocation5 + $0xc0] sm:$0xff]
    %v100 = vld [vmem:[#allocation5 + $0xc8] sm:$0xff]
    %v101 = vld [vmem:[#allocation5 + $0xd0] sm:$0xff]
    %v102 = vld [vmem:[#allocation5 + $0xd8] sm:$0xff]
    %v103 = vld [vmem:[#allocation5 + $0xe0] sm:$0xff]
    %v104 = vld [vmem:[#allocation5 + $0xe8] sm:$0xff]
    %v105 = vld [vmem:[#allocation5 + $0xf0] sm:$0xff]
    %v106 = vld [vmem:[#allocation5 + $0xf8] sm:$0xff]
    %v107 = vld [vmem:[%s2] sm:$0x1]
    %v109 = vlaneseq
    %v110 = vshrl.u32 %v109, 7
    %v111 = vsub.s32 0, %v110
    %v112 = vrot.slane %v107, %v111
    %114 = vmatprep.subr.mxu0 0.0
    %115 = vmatpush1.msra.mxu0 %v75
    %116 = vmatprep.subr.mxu0 0.0
    %117 = vmatpush1.msra.mxu0 %v76
    %118 = vmatprep.subr.mxu0 0.0
    %119 = vmatpush1.msra.mxu0 %v77
    %120 = vmatprep.subr.mxu0 0.0
    %121 = vmatpush1.msra.mxu0 %v78
    %122 = vmatprep.subr.mxu0 0.0
    %123 = vmatpush1.msra.mxu0 %v79
    %124 = vmatprep.subr.mxu0 0.0
    %125 = vmatpush1.msra.mxu0 %v80
    %126 = vmatprep.subr.mxu0 0.0
    %127 = vmatpush1.msra.mxu0 %v81
    %128 = vmatprep.subr.mxu0 0.0
    %129 = vmatpush1.msra.mxu0 %v82
    %130 = vmatprep.subr.mxu0 0.0
    %131 = vmatpush1.msra.mxu0 %v83
    %132 = vmatprep.subr.mxu0 0.0
    %133 = vmatpush1.msra.mxu0 %v84
    %134 = vmatprep.subr.mxu0 0.0
    %135 = vmatpush1.msra.mxu0 %v85
    %136 = vmatprep.subr.mxu0 0.0
    %137 = vmatpush1.msra.mxu0 %v86
    %138 = vmatprep.subr.mxu0 0.0
    %139 = vmatpush1.msra.mxu0 %v87
    %140 = vmatprep.subr.mxu0 0.0
    %141 = vmatpush1.msra.mxu0 %v88
    %142 = vmatprep.subr.mxu0 0.0
    %143 = vmatpush1.msra.mxu0 %v89
    %144 = vmatprep.subr.mxu0 0.0
    %145 = vmatpush1.msra.mxu0 %v90
    %146 = vmatprep.subr.mxu0 0.0
    %147 = vmatpush1.msra.mxu0 %v91
    %148 = vmatprep.subr.mxu0 0.0
    %149 = vmatpush1.msra.mxu0 %v92
    %150 = vmatprep.subr.mxu0 0.0
    %151 = vmatpush1.msra.mxu0 %v93
    %152 = vmatprep.subr.mxu0 0.0
    %153 = vmatpush1.msra.mxu0 %v94
    %154 = vmatprep.subr.mxu0 0.0
    %155 = vmatpush1.msra.mxu0 %v95
    %156 = vmatprep.subr.mxu0 0.0
    %157 = vmatpush1.msra.mxu0 %v96
    %158 = vmatprep.subr.mxu0 0.0
    %159 = vmatpush1.msra.mxu0 %v97
    %160 = vmatprep.subr.mxu0 0.0
    %161 = vmatpush1.msra.mxu0 %v98
    %162 = vmatprep.subr.mxu0 0.0
    %163 = vmatpush1.msra.mxu0 %v99
    %164 = vmatprep.subr.mxu0 0.0
    %165 = vmatpush1.msra.mxu0 %v100
    %166 = vmatprep.subr.mxu0 0.0
    %167 = vmatpush1.msra.mxu0 %v101
    %168 = vmatprep.subr.mxu0 0.0
    %169 = vmatpush1.msra.mxu0 %v102
    %170 = vmatprep.subr.mxu0 0.0
    %171 = vmatpush1.msra.mxu0 %v103
    %172 = vmatprep.subr.mxu0 0.0
    %173 = vmatpush1.msra.mxu0 %v104
    %174 = vmatprep.subr.mxu0 0.0
    %175 = vmatpush1.msra.mxu0 %v105
    %176 = vmatprep.subr.mxu0 0.0
    %177 = vmatpush1.msra.mxu0 %v106
    %178 = vmatprep.mubr.f32.mxu0 %v44
    %179 = vmatmul.mubr.f32.gmra.mrb[0].mxu0 %v43
    %v180 = vpop.f32.mrb[0].mxu0
    %v181 = vadd.f32 %v112, %v180
    %v182 = vpop.f32.mrb[0].mxu0
    %183 = vmatprep.mubr.f32.mxu0 %v46
    %184 = vmatmul.mubr.f32.gmra.mrb[0].mxu0 %v45
    %v185 = vpop.f32.mrb[0].mxu0
    %v186 = vadd.f32 %v112, %v185
    %v187 = vpop.f32.mrb[0].mxu0
    %188 = vmatprep.mubr.f32.mxu0 %v48
    %189 = vmatmul.mubr.f32.gmra.mrb[0].mxu0 %v47
    %v190 = vpop.f32.mrb[0].mxu0
    %v191 = vadd.f32 %v112, %v190
    %v192 = vpop.f32.mrb[0].mxu0
    %193 = vmatprep.mubr.f32.mxu0 %v50
    %194 = vmatmul.mubr.f32.gmra.mrb[0].mxu0 %v49
    %v195 = vpop.f32.mrb[0].mxu0
    %v196 = vadd.f32 %v112, %v195
    %v197 = vpop.f32.mrb[0].mxu0
    %198 = vmatprep.mubr.f32.mxu0 %v52
    %199 = vmatmul.mubr.f32.gmra.mrb[0].mxu0 %v51
    %v200 = vpop.f32.mrb[0].mxu0
    %v201 = vadd.f32 %v112, %v200
    %v202 = vpop.f32.mrb[0].mxu0
    %203 = vmatprep.mubr.f32.mxu0 %v54
    %204 = vmatmul.mubr.f32.gmra.mrb[0].mxu0 %v53
    %v205 = vpop.f32.mrb[0].mxu0
    %v206 = vadd.f32 %v112, %v205
    %v207 = vpop.f32.mrb[0].mxu0
    %208 = vmatprep.mubr.f32.mxu0 %v56
    %209 = vmatmul.mubr.f32.gmra.mrb[0].mxu0 %v55
    %v210 = vpop.f32.mrb[0].mxu0
    %v211 = vadd.f32 %v112, %v210
    %v212 = vpop.f32.mrb[0].mxu0
    %213 = vmatprep.mubr.f32.mxu0 %v58
    %214 = vmatmul.mubr.f32.gmra.mrb[0].mxu0 %v57
    %v215 = vpop.f32.mrb[0].mxu0
    %v216 = vadd.f32 %v112, %v215
    %v217 = vpop.f32.mrb[0].mxu0
    %218 = vmatprep.mubr.f32.mxu0 %v60
    %219 = vmatmul.mubr.f32.gmra.mrb[0].mxu0 %v59
    %v220 = vpop.f32.mrb[0].mxu0
    %v221 = vadd.f32 %v112, %v220
    %v222 = vpop.f32.mrb[0].mxu0
    %223 = vmatprep.mubr.f32.mxu0 %v62
    %224 = vmatmul.mubr.f32.gmra.mrb[0].mxu0 %v61
    %v225 = vpop.f32.mrb[0].mxu0
    %v226 = vadd.f32 %v112, %v225
    %v227 = vpop.f32.mrb[0].mxu0
    %228 = vmatprep.mubr.f32.mxu0 %v64
    %229 = vmatmul.mubr.f32.gmra.mrb[0].mxu0 %v63
    %v230 = vpop.f32.mrb[0].mxu0
    %v231 = vadd.f32 %v112, %v230
    %v232 = vpop.f32.mrb[0].mxu0
    %233 = vmatprep.mubr.f32.mxu0 %v66
    %234 = vmatmul.mubr.f32.gmra.mrb[0].mxu0 %v65
    %v235 = vpop.f32.mrb[0].mxu0
    %v236 = vadd.f32 %v112, %v235
    %v237 = vpop.f32.mrb[0].mxu0
    %238 = vmatprep.mubr.f32.mxu0 %v68
    %239 = vmatmul.mubr.f32.gmra.mrb[0].mxu0 %v67
    %v240 = vpop.f32.mrb[0].mxu0
    %v241 = vadd.f32 %v112, %v240
    %v242 = vpop.f32.mrb[0].mxu0
    %243 = vmatprep.mubr.f32.mxu0 %v70
    %244 = vmatmul.mubr.f32.gmra.mrb[0].mxu0 %v69
    %v245 = vpop.f32.mrb[0].mxu0
    %v246 = vadd.f32 %v112, %v245
    %v247 = vpop.f32.mrb[0].mxu0
    %248 = vmatprep.mubr.f32.mxu0 %v72
    %249 = vmatmul.mubr.f32.gmra.mrb[0].mxu0 %v71
    %v250 = vpop.f32.mrb[0].mxu0
    %v251 = vadd.f32 %v112, %v250
    %v252 = vpop.f32.mrb[0].mxu0
    %253 = vmatprep.mubr.f32.mxu0 %v74
    %254 = vmatmul.mubr.f32.gmra.mrb[0].mxu0 %v73
    %v255 = vpop.f32.mrb[0].mxu0
    %v256 = vadd.f32 %v112, %v255
    %v257 = vpop.f32.mrb[0].mxu0
    %258 = vdwg.mxu0
    %v259 = vmax.f32 %v181, 0.0
    %v260 = vmax.f32 %v186, 0.0
    %v261 = vmax.f32 %v191, 0.0
    %v262 = vmax.f32 %v196, 0.0
    %v263 = vmax.f32 %v201, 0.0
    %v264 = vmax.f32 %v206, 0.0
    %v265 = vmax.f32 %v211, 0.0
    %v266 = vmax.f32 %v216, 0.0
    %v267 = vmax.f32 %v221, 0.0
    %v268 = vmax.f32 %v226, 0.0
    %v269 = vmax.f32 %v231, 0.0
    %v270 = vmax.f32 %v236, 0.0
    %v271 = vmax.f32 %v241, 0.0
    %v272 = vmax.f32 %v246, 0.0
    %v273 = vmax.f32 %v251, 0.0
    %v274 = vmax.f32 %v256, 0.0
    %275 = vst [vmem:[#allocation7] sm:$0xff] %v259
    %276 = vst [vmem:[#allocation7 + $0x8] sm:$0xff] %v260
    %277 = vst [vmem:[#allocation7 + $0x10] sm:$0xff] %v261
    %278 = vst [vmem:[#allocation7 + $0x18] sm:$0xff] %v262
    %279 = vst [vmem:[#allocation7 + $0x20] sm:$0xff] %v263
    %280 = vst [vmem:[#allocation7 + $0x28] sm:$0xff] %v264
    %281 = vst [vmem:[#allocation7 + $0x30] sm:$0xff] %v265
    %282 = vst [vmem:[#allocation7 + $0x38] sm:$0xff] %v266
    %283 = vst [vmem:[#allocation7 + $0x40] sm:$0xff] %v267
    %284 = vst [vmem:[#allocation7 + $0x48] sm:$0xff] %v268
    %285 = vst [vmem:[#allocation7 + $0x50] sm:$0xff] %v269
    %286 = vst [vmem:[#allocation7 + $0x58] sm:$0xff] %v270
    %287 = vst [vmem:[#allocation7 + $0x60] sm:$0xff] %v271
    %288 = vst [vmem:[#allocation7 + $0x68] sm:$0xff] %v272
    %289 = vst [vmem:[#allocation7 + $0x70] sm:$0xff] %v273
    %290 = vst [vmem:[#allocation7 + $0x78] sm:$0xff] %v274
    // Predicated region
    $region22: #{tpu_custom_call.1} parent=1 // pred_check
      _
    $region23: #{tpu_custom_call.1} parent=1 // pred_check_branch
      %292 = sbr.rel (0) target = $region25
    $region24: #{tpu_custom_call.1} parent=1 // pred_region
      %s294 = ssub.s32 2048, 2048
      %295 = vsyncadd [#allocation4], %s294
      %s296 = sshll.u32 [#allocation7], 4
      %s297 = int_to_ptr.vmem [resolvable:$true] %s296
      %302 = dma.vmem_to_hbm [thread:$0]  %s297, 2048, %s3, [#allocation4], 128, 128, 8
    $region25: #{tpu_custom_call.1} parent=1 // pred_fallthru
      _
    // Predicated region
    $region26: #{tpu_custom_call.1} parent=1 // pred_check
      _
    $region27: #{tpu_custom_call.1} parent=1 // pred_check_branch
      %304 = sbr.rel (0) target = $region29
    $region28: #{tpu_custom_call.1} parent=1 // pred_region
      %305 = dma.done [#allocation4], 2048
    $region29: #{tpu_custom_call.1} parent=1 // pred_fallthru
      _
    %306 = vsyncpa [#allocation3], 1
    %307 = vsyncpa [#allocation6], 1
    %308 = vsyncpa [#allocation4], 1

</llo_original>
